<compile_context>
chip_gen: v6e
topology: v6e:2x2x1
jax: 0.10.0
libtpu: 0.0.40
codegen_flags: <defaults>
</compile_context>

<pallas_src>
import functools

import jax
import jax.numpy as jnp
from jax.experimental import pallas as pl
from jax.experimental.pallas import tpu as pltpu


def _round_up(x, m):
    return ((x + m - 1) // m) * m


# ---------------------------------------------------------------------------
# Kernel: per-time-tile masked partial sums, lane-dense over M = ngage * ny
# ---------------------------------------------------------------------------
def _sigma_partials_kernel(p_ref, s_ref, t_ref, o_ref):
    p = p_ref[...]                       # (Tt, M) f32
    s = s_ref[...]                       # (Tt, M) f32
    t = t_ref[...]                       # (Tt, M) f32
    mask = t == t                        # NaN mask comes from the target only
    zero = jnp.float32(0.0)

    es = jnp.exp(-s)
    d = jnp.where(mask, p - t, zero)

    sum_sq = jnp.sum(jnp.where(mask, es * d * d, zero), axis=0, keepdims=True)
    sum_s = jnp.sum(jnp.where(mask, s, zero), axis=0, keepdims=True)
    sum_es = jnp.sum(jnp.where(mask, es, zero), axis=0, keepdims=True)
    cnt = jnp.sum(mask.astype(jnp.float32), axis=0, keepdims=True)

    # Single lane-dense store of all four partials: (1, 4, M).
    o_ref[...] = jnp.concatenate([sum_sq, sum_s, sum_es, cnt], axis=0)[None, :, :]


# ---------------------------------------------------------------------------
# Wrapper
# ---------------------------------------------------------------------------
def sigma_loss(output, target, prior="gauss", c1=0.0, c2=0.0):
    """output: (nt, ngage, 2*ny) [p, sigma interleaved]; target: (nt, ngage, ny)."""
    output = jnp.asarray(output, jnp.float32)
    target = jnp.asarray(target, jnp.float32)
    nt, ngage, ny = target.shape
    assert output.shape == (nt, ngage, 2 * ny), (output.shape, target.shape)
    M = ngage * ny

    # De-interleave (p, sigma) once; flatten (gauge, variable) onto lanes.
    p2 = output[:, :, 0::2].reshape(nt, M)
    s2 = output[:, :, 1::2].reshape(nt, M)
    t2 = target.reshape(nt, M)

    # Time-tile size: double-buffered 3-input footprint <= ~24 MiB.
    m_pad = _round_up(M, 128)
    budget_rows = (24 * 1024 * 1024) // (2 * 3 * m_pad * 4)
    tt = max(8, min(_round_up(nt, 8), (budget_rows // 8) * 8, 2048))
    nt_pad = _round_up(nt, tt)
    if nt_pad != nt:
        pad = nt_pad - nt
        p2 = jnp.pad(p2, ((0, pad), (0, 0)))
        s2 = jnp.pad(s2, ((0, pad), (0, 0)))
        # Padded rows carry NaN targets so they are masked out inside the kernel.
        t2 = jnp.pad(t2, ((0, pad), (0, 0)), constant_values=float("nan"))
    num_tiles = nt_pad // tt

    in_spec = pl.BlockSpec((tt, M), lambda i: (i, 0))
    partials = pl.pallas_call(
        _sigma_partials_kernel,
        grid=(num_tiles,),
        out_shape=jax.ShapeDtypeStruct((num_tiles, 4, M), jnp.float32),
        in_specs=[in_spec, in_spec, in_spec],
        out_specs=pl.BlockSpec((1, 4, M), lambda i: (i, 0, 0)),
        compiler_params=pltpu.CompilerParams(
            dimension_semantics=("parallel",),
            vmem_limit_bytes=48 * 1024 * 1024,   # right-sized: <= v7x 64 MiB physical
        ),
    )(p2, s2, t2)

    # Tiny final combine in plain JAX.
    tot = jnp.sum(partials, axis=0).reshape(4, ngage, ny).sum(axis=1)  # (4, ny)
    sum_sq, sum_s, sum_es, cnt = tot[0], tot[1], tot[2], tot[3]

    if prior == "gauss":
        per_k = (0.5 * sum_sq + 0.5 * sum_s) / cnt
    elif prior == "invGamma":
        per_k = (0.5 * sum_sq
                 + 0.5 * (jnp.float32(c2) / cnt) * sum_es
                 + (0.5 + jnp.float32(c1) / cnt) * sum_s) / cnt
    else:
        raise ValueError(f"unsupported prior: {prior!r}")
    # NOTE: cnt == 0 (all-NaN target for a variable) yields NaN, matching
    # torch.mean over an empty selection.
    return jnp.sum(per_k)


class SigmaLoss:
    """Mirror of the PyTorch module. prior: 'gauss' or 'invGamma+c1+c2'."""

    def __init__(self, prior="gauss"):
        self.prior = None if prior == "" else prior.split("+")

    def __call__(self, output, target):
        if self.prior is None:
            # TODO(synk): prior='' has no defined behavior (PyTorch forward also fails).
            raise ValueError("prior='' is unsupported")
        kind = self.prior[0]
        if kind == "invGamma":
            return sigma_loss(output, target, prior="invGamma",
                              c1=float(self.prior[1]), c2=float(self.prior[2]))
        return sigma_loss(output, target, prior=kind)


# ---------------------------------------------------------------------------
# Pure-JAX reference (for the self-check)
# ---------------------------------------------------------------------------
def _ref_sigma_loss(output, target):
    ny = target.shape[-1]
    total = jnp.float32(0.0)
    for k in range(ny):
        p = output[:, :, 2 * k]
        s = output[:, :, 2 * k + 1]
        t = target[:, :, k]
        m = ~jnp.isnan(t)
        lv = jnp.exp(-s) * (p - t) ** 2 / 2 + s / 2
        total = total + jnp.sum(jnp.where(m, lv, 0.0)) / jnp.sum(m)
    return total


if __name__ == "__main__":
    nt, ngage, ny = 100, 4, 2
    key = jax.random.PRNGKey(0)
    k1, k2, k3 = jax.random.split(key, 3)

    target = jax.random.normal(k1, (nt, ngage, ny), dtype=jnp.float32)
    # Sprinkle NaNs into the target to exercise the masking path.
    nan_mask = jax.random.bernoulli(k3, 0.15, target.shape)
    target = jnp.where(nan_mask, jnp.float32(jnp.nan), target)
    output = jax.random.normal(k2, (nt, ngage, 2 * ny), dtype=jnp.float32)

    loss_fn = jax.jit(lambda o, t: sigma_loss(o, t, prior="gauss"))
    loss = jax.block_until_ready(loss_fn(output, target))

    ref = jax.block_until_ready(_ref_sigma_loss(output, target))
    assert bool(jnp.isfinite(loss)), "loss is not finite"
    assert bool(jnp.allclose(loss, ref, rtol=1e-4, atol=1e-5)), (loss, ref)
    print("KERNEL_OK")
</pallas_src>

<mosaic_0001>
module attributes {stable_mosaic.version = 11 : i64} {
  func.func @_sigma_partials_kernel(%arg0: i32, %arg1: memref<104x8xf32, #tpu.memory_space<vmem>>, %arg2: memref<104x8xf32, #tpu.memory_space<vmem>>, %arg3: memref<104x8xf32, #tpu.memory_space<vmem>>, %arg4: memref<1x4x8xf32, #tpu.memory_space<vmem>>) attributes {dimension_semantics = [#tpu.dimension_semantics<parallel>], iteration_bounds = array<i64: 1>, scalar_prefetch = 0 : i64, scratch_operands = 0 : i64, tpu.core_type = #tpu.core_type<tc>, window_params = [{transform_indices = @transform_0, window_bounds = array<i64: 104, 8>}, {transform_indices = @transform_1, window_bounds = array<i64: 104, 8>}, {transform_indices = @transform_2, window_bounds = array<i64: 104, 8>}, {transform_indices = @transform_3, window_bounds = array<i64: 1, 4, 8>}]} {
    %c0 = arith.constant 0 : index
    %c0_0 = arith.constant 0 : index
    %0 = vector.load %arg1[%c0, %c0_0] : memref<104x8xf32, #tpu.memory_space<vmem>>, vector<104x8xf32>
    %c0_1 = arith.constant 0 : index
    %c0_2 = arith.constant 0 : index
    %1 = vector.load %arg2[%c0_1, %c0_2] : memref<104x8xf32, #tpu.memory_space<vmem>>, vector<104x8xf32>
    %c0_3 = arith.constant 0 : index
    %c0_4 = arith.constant 0 : index
    %2 = vector.load %arg3[%c0_3, %c0_4] : memref<104x8xf32, #tpu.memory_space<vmem>>, vector<104x8xf32>
    %3 = arith.cmpf oeq, %2, %2 : vector<104x8xf32>
    %cst = arith.constant 0.000000e+00 : f32
    %4 = vector.broadcast %cst : f32 to vector<104x8xf32>
    %5 = arith.subf %4, %1 : vector<104x8xf32>
    %6 = math.exp %5 : vector<104x8xf32>
    %7 = arith.subf %0, %2 : vector<104x8xf32>
    %cst_5 = arith.constant 0.000000e+00 : f32
    %8 = vector.broadcast %cst_5 : f32 to vector<104x8xf32>
    %9 = arith.select %3, %7, %8 : vector<104x8xi1>, vector<104x8xf32>
    %10 = arith.mulf %6, %9 : vector<104x8xf32>
    %11 = arith.mulf %10, %9 : vector<104x8xf32>
    %cst_6 = arith.constant 0.000000e+00 : f32
    %12 = vector.broadcast %cst_6 : f32 to vector<104x8xf32>
    %13 = arith.select %3, %11, %12 : vector<104x8xi1>, vector<104x8xf32>
    %cst_7 = arith.constant dense<0.000000e+00> : vector<8xf32>
    %14 = vector.multi_reduction <add>, %13, %cst_7 [0] : vector<104x8xf32> to vector<8xf32>
    %15 = vector.shape_cast %14 : vector<8xf32> to vector<1x8xf32>
    %cst_8 = arith.constant 0.000000e+00 : f32
    %16 = vector.broadcast %cst_8 : f32 to vector<104x8xf32>
    %17 = arith.select %3, %1, %16 : vector<104x8xi1>, vector<104x8xf32>
    %cst_9 = arith.constant dense<0.000000e+00> : vector<8xf32>
    %18 = vector.multi_reduction <add>, %17, %cst_9 [0] : vector<104x8xf32> to vector<8xf32>
    %19 = vector.shape_cast %18 : vector<8xf32> to vector<1x8xf32>
    %cst_10 = arith.constant 0.000000e+00 : f32
    %20 = vector.broadcast %cst_10 : f32 to vector<104x8xf32>
    %21 = arith.select %3, %6, %20 : vector<104x8xi1>, vector<104x8xf32>
    %cst_11 = arith.constant dense<0.000000e+00> : vector<8xf32>
    %22 = vector.multi_reduction <add>, %21, %cst_11 [0] : vector<104x8xf32> to vector<8xf32>
    %23 = vector.shape_cast %22 : vector<8xf32> to vector<1x8xf32>
    %24 = arith.extui %3 : vector<104x8xi1> to vector<104x8xi32>
    %25 = arith.sitofp %24 : vector<104x8xi32> to vector<104x8xf32>
    %cst_12 = arith.constant dense<0.000000e+00> : vector<8xf32>
    %26 = vector.multi_reduction <add>, %25, %cst_12 [0] : vector<104x8xf32> to vector<8xf32>
    %27 = vector.shape_cast %26 : vector<8xf32> to vector<1x8xf32>
    %28 = tpu.concatenate %15, %19, %23, %27 in 0 : vector<1x8xf32>, vector<1x8xf32>, vector<1x8xf32>, vector<1x8xf32> -> vector<4x8xf32>
    %29 = vector.shape_cast %28 : vector<4x8xf32> to vector<1x4x8xf32>
    %c0_13 = arith.constant 0 : index
    %c0_14 = arith.constant 0 : index
    %c0_15 = arith.constant 0 : index
    %30 = vector.load %arg4[%c0_13, %c0_14, %c0_15] : memref<1x4x8xf32, #tpu.memory_space<vmem>>, vector<1x4x8xf32>
    tpu.vector_store %arg4[%c0_13, %c0_14, %c0_15], %29 {strides = array<i32>} : memref<1x4x8xf32, #tpu.memory_space<vmem>>, vector<1x4x8xf32>,
    return
  }
  func.func @transform_0(%arg0: i32) -> (i32, i32) {
    %c0_i32 = arith.constant 0 : i32
    %c0_i32_0 = arith.constant 0 : i32
    return %arg0, %c0_i32 : i32, i32
  }
  func.func @transform_1(%arg0: i32) -> (i32, i32) {
    %c0_i32 = arith.constant 0 : i32
    %c0_i32_0 = arith.constant 0 : i32
    return %arg0, %c0_i32 : i32, i32
  }
  func.func @transform_2(%arg0: i32) -> (i32, i32) {
    %c0_i32 = arith.constant 0 : i32
    %c0_i32_0 = arith.constant 0 : i32
    return %arg0, %c0_i32 : i32, i32
  }
  func.func @transform_3(%arg0: i32) -> (i32, i32, i32) {
    %c0_i32 = arith.constant 0 : i32
    %c0_i32_0 = arith.constant 0 : i32
    %c0_i32_1 = arith.constant 0 : i32
    return %arg0, %c0_i32, %c0_i32_0 : i32, i32, i32
  }
}

</mosaic_0001>

<llo_original>
// kernel: _lambda_.1
$region0: #{_lambda_.1}
  #allocation0 [shape = 'u32[]', space=smem, size = 0x4, offset = 0x4, fixed_abs, tag = 'smem constant byte address 0x4 - core index']
  #allocation1 [shape = 'u32[144,128]{1,0:T(1,128)}', space=vmem, size = 0x12000, scoped, tag = 'internal scratch']
  %s0 = inlined_call_operand.vmem [shape: f32[104,8], index: 0, kind: input, shape index: {}]
  %s1 = inlined_call_operand.vmem [shape: f32[104,8], index: 1, kind: input, shape index: {}]
  %s2 = inlined_call_operand.vmem [shape: f32[104,8], index: 2, kind: input, shape index: {}]
  %s3 = inlined_call_operand.vmem [shape: f32[1,4,8], index: 3, kind: output, shape index: {}]
  %s4 = sld [smem:[#allocation0]]
  $region22: #{_lambda_.1} parent=0
    _
  %s6 = ssub.s32 1, %s4
  %s7 = scalar_select 0, %s6, %s4
  // Predicated region
  $region2: #{_lambda_.1} parent=0 // pred_check
    _
  $region3: #{_lambda_.1} parent=0 // pred_check_branch
    %9 = sbr.rel (0) target = $region5
  $region4: #{_lambda_.1} parent=0 // pred_region
    _
  $region5: #{_lambda_.1} parent=0 // pred_fallthru
    _
  // Predicated region
  $region6: #{_lambda_.1} parent=0 // pred_check
    _
  $region7: #{_lambda_.1} parent=0 // pred_check_branch
    %11 = sbr.rel (0) target = $region9
  $region8: #{_lambda_.1} parent=0 // pred_region
    _
  $region9: #{_lambda_.1} parent=0 // pred_fallthru
    _
  // Predicated region
  $region10: #{_lambda_.1} parent=0 // pred_check
    _
  $region11: #{_lambda_.1} parent=0 // pred_check_branch
    %13 = sbr.rel (0) target = $region13
  $region12: #{_lambda_.1} parent=0 // pred_region
    _
  $region13: #{_lambda_.1} parent=0 // pred_fallthru
    _
  %v14 = vld [vmem:[%s0] sm:$0xff]
  %v15 = vld [vmem:[%s0 + $0x8] sm:$0xff]
  %v16 = vld [vmem:[%s0 + $0x10] sm:$0xff]
  %v17 = vld [vmem:[%s0 + $0x18] sm:$0xff]
  %v18 = vld [vmem:[%s0 + $0x20] sm:$0xff]
  %v19 = vld [vmem:[%s0 + $0x28] sm:$0xff]
  %v20 = vld [vmem:[%s0 + $0x30] sm:$0xff]
  %v21 = vld [vmem:[%s0 + $0x38] sm:$0xff]
  %v22 = vld [vmem:[%s0 + $0x40] sm:$0xff]
  %v23 = vld [vmem:[%s0 + $0x48] sm:$0xff]
  %v24 = vld [vmem:[%s0 + $0x50] sm:$0xff]
  %v25 = vld [vmem:[%s0 + $0x58] sm:$0xff]
  %v26 = vld [vmem:[%s0 + $0x60] sm:$0xff]
  %v27 = vld [vmem:[%s1] sm:$0xff]
  %v28 = vld [vmem:[%s1 + $0x8] sm:$0xff]
  %v29 = vld [vmem:[%s1 + $0x10] sm:$0xff]
  %v30 = vld [vmem:[%s1 + $0x18] sm:$0xff]
  %v31 = vld [vmem:[%s1 + $0x20] sm:$0xff]
  %v32 = vld [vmem:[%s1 + $0x28] sm:$0xff]
  %v33 = vld [vmem:[%s1 + $0x30] sm:$0xff]
  %v34 = vld [vmem:[%s1 + $0x38] sm:$0xff]
  %v35 = vld [vmem:[%s1 + $0x40] sm:$0xff]
  %v36 = vld [vmem:[%s1 + $0x48] sm:$0xff]
  %v37 = vld [vmem:[%s1 + $0x50] sm:$0xff]
  %v38 = vld [vmem:[%s1 + $0x58] sm:$0xff]
  %v39 = vld [vmem:[%s1 + $0x60] sm:$0xff]
  %v40 = vld [vmem:[%s2] sm:$0xff]
  %v41 = vld [vmem:[%s2 + $0x8] sm:$0xff]
  %v42 = vld [vmem:[%s2 + $0x10] sm:$0xff]
  %v43 = vld [vmem:[%s2 + $0x18] sm:$0xff]
  %v44 = vld [vmem:[%s2 + $0x20] sm:$0xff]
  %v45 = vld [vmem:[%s2 + $0x28] sm:$0xff]
  %v46 = vld [vmem:[%s2 + $0x30] sm:$0xff]
  %v47 = vld [vmem:[%s2 + $0x38] sm:$0xff]
  %v48 = vld [vmem:[%s2 + $0x40] sm:$0xff]
  %v49 = vld [vmem:[%s2 + $0x48] sm:$0xff]
  %v50 = vld [vmem:[%s2 + $0x50] sm:$0xff]
  %v51 = vld [vmem:[%s2 + $0x58] sm:$0xff]
  %v52 = vld [vmem:[%s2 + $0x60] sm:$0xff]
  %vm53 = vcmp.eq.f32.partialorder %v40, %v40
  %vm54 = vcmp.eq.f32.partialorder %v41, %v41
  %vm55 = vcmp.eq.f32.partialorder %v42, %v42
  %vm56 = vcmp.eq.f32.partialorder %v43, %v43
  %vm57 = vcmp.eq.f32.partialorder %v44, %v44
  %vm58 = vcmp.eq.f32.partialorder %v45, %v45
  %vm59 = vcmp.eq.f32.partialorder %v46, %v46
  %vm60 = vcmp.eq.f32.partialorder %v47, %v47
  %vm61 = vcmp.eq.f32.partialorder %v48, %v48
  %vm62 = vcmp.eq.f32.partialorder %v49, %v49
  %vm63 = vcmp.eq.f32.partialorder %v50, %v50
  %vm64 = vcmp.eq.f32.partialorder %v51, %v51
  %vm65 = vcmp.eq.f32.partialorder %v52, %v52
  %v66 = vsub.f32 0.0, %v27
  %v67 = vsub.f32 0.0, %v28
  %v68 = vsub.f32 0.0, %v29
  %v69 = vsub.f32 0.0, %v30
  %v70 = vsub.f32 0.0, %v31
  %v71 = vsub.f32 0.0, %v32
  %v72 = vsub.f32 0.0, %v33
  %v73 = vsub.f32 0.0, %v34
  %v74 = vsub.f32 0.0, %v35
  %v75 = vsub.f32 0.0, %v36
  %v76 = vsub.f32 0.0, %v37
  %v77 = vsub.f32 0.0, %v38
  %v78 = vsub.f32 0.0, %v39
  %v79 = vmul.f32 %v66, 1.442695
  %v80 = vpow.pop %v79
  %v81 = vmul.f32 %v67, 1.442695
  %v82 = vpow.pop %v81
  %v83 = vmul.f32 %v68, 1.442695
  %v84 = vpow.pop %v83
  %v85 = vmul.f32 %v69, 1.442695
  %v86 = vpow.pop %v85
  %v87 = vmul.f32 %v70, 1.442695
  %v88 = vpow.pop %v87
  %v89 = vmul.f32 %v71, 1.442695
  %v90 = vpow.pop %v89
  %v91 = vmul.f32 %v72, 1.442695
  %v92 = vpow.pop %v91
  %v93 = vmul.f32 %v73, 1.442695
  %v94 = vpow.pop %v93
  %v95 = vmul.f32 %v74, 1.442695
  %v96 = vpow.pop %v95
  %v97 = vmul.f32 %v75, 1.442695
  %v98 = vpow.pop %v97
  %v99 = vmul.f32 %v76, 1.442695
  %v100 = vpow.pop %v99
  %v101 = vmul.f32 %v77, 1.442695
  %v102 = vpow.pop %v101
  %v103 = vmul.f32 %v78, 1.442695
  %v104 = vpow.pop %v103
  %v105 = vsub.f32 %v14, %v40
  %v106 = vsub.f32 %v15, %v41
  %v107 = vsub.f32 %v16, %v42
  %v108 = vsub.f32 %v17, %v43
  %v109 = vsub.f32 %v18, %v44
  %v110 = vsub.f32 %v19, %v45
  %v111 = vsub.f32 %v20, %v46
  %v112 = vsub.f32 %v21, %v47
  %v113 = vsub.f32 %v22, %v48
  %v114 = vsub.f32 %v23, %v49
  %v115 = vsub.f32 %v24, %v50
  %v116 = vsub.f32 %v25, %v51
  %v117 = vsub.f32 %v26, %v52
  %v118 = vsel %vm53, %v105, 0.0
  %v119 = vsel %vm54, %v106, 0.0
  %v120 = vsel %vm55, %v107, 0.0
  %v121 = vsel %vm56, %v108, 0.0
  %v122 = vsel %vm57, %v109, 0.0
  %v123 = vsel %vm58, %v110, 0.0
  %v124 = vsel %vm59, %v111, 0.0
  %v125 = vsel %vm60, %v112, 0.0
  %v126 = vsel %vm61, %v113, 0.0
  %v127 = vsel %vm62, %v114, 0.0
  %v128 = vsel %vm63, %v115, 0.0
  %v129 = vsel %vm64, %v116, 0.0
  %v130 = vsel %vm65, %v117, 0.0
  %v131 = vmul.f32 %v80, %v118
  %v132 = vmul.f32 %v82, %v119
  %v133 = vmul.f32 %v84, %v120
  %v134 = vmul.f32 %v86, %v121
  %v135 = vmul.f32 %v88, %v122
  %v136 = vmul.f32 %v90, %v123
  %v137 = vmul.f32 %v92, %v124
  %v138 = vmul.f32 %v94, %v125
  %v139 = vmul.f32 %v96, %v126
  %v140 = vmul.f32 %v98, %v127
  %v141 = vmul.f32 %v100, %v128
  %v142 = vmul.f32 %v102, %v129
  %v143 = vmul.f32 %v104, %v130
  %v144 = vmul.f32 %v131, %v118
  %v145 = vmul.f32 %v132, %v119
  %v146 = vmul.f32 %v133, %v120
  %v147 = vmul.f32 %v134, %v121
  %v148 = vmul.f32 %v135, %v122
  %v149 = vmul.f32 %v136, %v123
  %v150 = vmul.f32 %v137, %v124
  %v151 = vmul.f32 %v138, %v125
  %v152 = vmul.f32 %v139, %v126
  %v153 = vmul.f32 %v140, %v127
  %v154 = vmul.f32 %v141, %v128
  %v155 = vmul.f32 %v142, %v129
  %v156 = vmul.f32 %v143, %v130
  %v157 = vsel %vm53, %v144, 0.0
  %v158 = vsel %vm54, %v145, 0.0
  %v159 = vsel %vm55, %v146, 0.0
  %v160 = vsel %vm56, %v147, 0.0
  %v161 = vsel %vm57, %v148, 0.0
  %v162 = vsel %vm58, %v149, 0.0
  %v163 = vsel %vm59, %v150, 0.0
  %v164 = vsel %vm60, %v151, 0.0
  %v165 = vsel %vm61, %v152, 0.0
  %v166 = vsel %vm62, %v153, 0.0
  %v167 = vsel %vm63, %v154, 0.0
  %v168 = vsel %vm64, %v155, 0.0
  %v169 = vsel %vm65, %v156, 0.0
  %vm170 = vcmask 64512
  %v171 = vsel %vm170, %v157, 0.0
  %v172 = vsel %vm170, %v158, 0.0
  %v173 = vadd.f32 %v171, %v172
  %v174 = vsel %vm170, %v159, 0.0
  %v175 = vadd.f32 %v173, %v174
  %v176 = vsel %vm170, %v160, 0.0
  %v177 = vadd.f32 %v175, %v176
  %v178 = vsel %vm170, %v161, 0.0
  %v179 = vadd.f32 %v177, %v178
  %v180 = vsel %vm170, %v162, 0.0
  %v181 = vadd.f32 %v179, %v180
  %v182 = vsel %vm170, %v163, 0.0
  %v183 = vadd.f32 %v181, %v182
  %v184 = vsel %vm170, %v164, 0.0
  %v185 = vadd.f32 %v183, %v184
  %v186 = vsel %vm170, %v165, 0.0
  %v187 = vadd.f32 %v185, %v186
  %v188 = vsel %vm170, %v166, 0.0
  %v189 = vadd.f32 %v187, %v188
  %v190 = vsel %vm170, %v167, 0.0
  %v191 = vadd.f32 %v189, %v190
  %v192 = vsel %vm170, %v168, 0.0
  %v193 = vadd.f32 %v191, %v192
  %v194 = vsel %vm170, %v169, 0.0
  %v195 = vadd.f32 %v193, %v194
  %v196 = vrot.slane %v195, 4
  %v197 = vadd.f32 %v195, %v196
  %v198 = vrot.slane %v197, 2
  %v199 = vadd.f32 %v197, %v198
  %v200 = vrot.slane %v199, 1
  %v201 = vadd.f32 %v199, %v200
  %v202 = vsel %vm53, %v27, 0.0
  %v203 = vsel %vm54, %v28, 0.0
  %v204 = vsel %vm55, %v29, 0.0
  %v205 = vsel %vm56, %v30, 0.0
  %v206 = vsel %vm57, %v31, 0.0
  %v207 = vsel %vm58, %v32, 0.0
  %v208 = vsel %vm59, %v33, 0.0
  %v209 = vsel %vm60, %v34, 0.0
  %v210 = vsel %vm61, %v35, 0.0
  %v211 = vsel %vm62, %v36, 0.0
  %v212 = vsel %vm63, %v37, 0.0
  %v213 = vsel %vm64, %v38, 0.0
  %v214 = vsel %vm65, %v39, 0.0
  %v215 = vsel %vm170, %v202, 0.0
  %v216 = vsel %vm170, %v203, 0.0
  %v217 = vadd.f32 %v215, %v216
  %v218 = vsel %vm170, %v204, 0.0
  %v219 = vadd.f32 %v217, %v218
  %v220 = vsel %vm170, %v205, 0.0
  %v221 = vadd.f32 %v219, %v220
  %v222 = vsel %vm170, %v206, 0.0
  %v223 = vadd.f32 %v221, %v222
  %v224 = vsel %vm170, %v207, 0.0
  %v225 = vadd.f32 %v223, %v224
  %v226 = vsel %vm170, %v208, 0.0
  %v227 = vadd.f32 %v225, %v226
  %v228 = vsel %vm170, %v209, 0.0
  %v229 = vadd.f32 %v227, %v228
  %v230 = vsel %vm170, %v210, 0.0
  %v231 = vadd.f32 %v229, %v230
  %v232 = vsel %vm170, %v211, 0.0
  %v233 = vadd.f32 %v231, %v232
  %v234 = vsel %vm170, %v212, 0.0
  %v235 = vadd.f32 %v233, %v234
  %v236 = vsel %vm170, %v213, 0.0
  %v237 = vadd.f32 %v235, %v236
  %v238 = vsel %vm170, %v214, 0.0
  %v239 = vadd.f32 %v237, %v238
  %v240 = vrot.slane %v239, 4
  %v241 = vadd.f32 %v239, %v240
  %v242 = vrot.slane %v241, 2
  %v243 = vadd.f32 %v241, %v242
  %v244 = vrot.slane %v243, 1
  %v245 = vadd.f32 %v243, %v244
  %v246 = vsel %vm53, %v80, 0.0
  %v247 = vsel %vm54, %v82, 0.0
  %v248 = vsel %vm55, %v84, 0.0
  %v249 = vsel %vm56, %v86, 0.0
  %v250 = vsel %vm57, %v88, 0.0
  %v251 = vsel %vm58, %v90, 0.0
  %v252 = vsel %vm59, %v92, 0.0
  %v253 = vsel %vm60, %v94, 0.0
  %v254 = vsel %vm61, %v96, 0.0
  %v255 = vsel %vm62, %v98, 0.0
  %v256 = vsel %vm63, %v100, 0.0
  %v257 = vsel %vm64, %v102, 0.0
  %v258 = vsel %vm65, %v104, 0.0
  %v259 = vsel %vm170, %v246, 0.0
  %v260 = vsel %vm170, %v247, 0.0
  %v261 = vadd.f32 %v259, %v260
  %v262 = vsel %vm170, %v248, 0.0
  %v263 = vadd.f32 %v261, %v262
  %v264 = vsel %vm170, %v249, 0.0
  %v265 = vadd.f32 %v263, %v264
  %v266 = vsel %vm170, %v250, 0.0
  %v267 = vadd.f32 %v265, %v266
  %v268 = vsel %vm170, %v251, 0.0
  %v269 = vadd.f32 %v267, %v268
  %v270 = vsel %vm170, %v252, 0.0
  %v271 = vadd.f32 %v269, %v270
  %v272 = vsel %vm170, %v253, 0.0
  %v273 = vadd.f32 %v271, %v272
  %v274 = vsel %vm170, %v254, 0.0
  %v275 = vadd.f32 %v273, %v274
  %v276 = vsel %vm170, %v255, 0.0
  %v277 = vadd.f32 %v275, %v276
  %v278 = vsel %vm170, %v256, 0.0
  %v279 = vadd.f32 %v277, %v278
  %v280 = vsel %vm170, %v257, 0.0
  %v281 = vadd.f32 %v279, %v280
  %v282 = vsel %vm170, %v258, 0.0
  %v283 = vadd.f32 %v281, %v282
  %v284 = vrot.slane %v283, 4
  %v285 = vadd.f32 %v283, %v284
  %v286 = vrot.slane %v285, 2
  %v287 = vadd.f32 %v285, %v286
  %v288 = vrot.slane %v287, 1
  %v289 = vadd.f32 %v287, %v288
  %v290 = vsel %vm53, 1, 0
  %v291 = vsel %vm54, 1, 0
  %v292 = vsel %vm55, 1, 0
  %v293 = vsel %vm56, 1, 0
  %v294 = vsel %vm57, 1, 0
  %v295 = vsel %vm58, 1, 0
  %v296 = vsel %vm59, 1, 0
  %v297 = vsel %vm60, 1, 0
  %v298 = vsel %vm61, 1, 0
  %v299 = vsel %vm62, 1, 0
  %v300 = vsel %vm63, 1, 0
  %v301 = vsel %vm64, 1, 0
  %v302 = vsel %vm65, 1, 0
  %v303 = vcvt.s32.f32 %v290
  %v304 = vcvt.s32.f32 %v291
  %v305 = vcvt.s32.f32 %v292
  %v306 = vcvt.s32.f32 %v293
  %v307 = vcvt.s32.f32 %v294
  %v308 = vcvt.s32.f32 %v295
  %v309 = vcvt.s32.f32 %v296
  %v310 = vcvt.s32.f32 %v297
  %v311 = vcvt.s32.f32 %v298
  %v312 = vcvt.s32.f32 %v299
  %v313 = vcvt.s32.f32 %v300
  %v314 = vcvt.s32.f32 %v301
  %v315 = vcvt.s32.f32 %v302
  %v316 = vsel %vm170, %v303, 0.0
  %v317 = vsel %vm170, %v304, 0.0
  %v318 = vadd.f32 %v316, %v317
  %v319 = vsel %vm170, %v305, 0.0
  %v320 = vadd.f32 %v318, %v319
  %v321 = vsel %vm170, %v306, 0.0
  %v322 = vadd.f32 %v320, %v321
  %v323 = vsel %vm170, %v307, 0.0
  %v324 = vadd.f32 %v322, %v323
  %v325 = vsel %vm170, %v308, 0.0
  %v326 = vadd.f32 %v324, %v325
  %v327 = vsel %vm170, %v309, 0.0
  %v328 = vadd.f32 %v326, %v327
  %v329 = vsel %vm170, %v310, 0.0
  %v330 = vadd.f32 %v328, %v329
  %v331 = vsel %vm170, %v311, 0.0
  %v332 = vadd.f32 %v330, %v331
  %v333 = vsel %vm170, %v312, 0.0
  %v334 = vadd.f32 %v332, %v333
  %v335 = vsel %vm170, %v313, 0.0
  %v336 = vadd.f32 %v334, %v335
  %v337 = vsel %vm170, %v314, 0.0
  %v338 = vadd.f32 %v336, %v337
  %v339 = vsel %vm170, %v315, 0.0
  %v340 = vadd.f32 %v338, %v339
  %v341 = vrot.slane %v340, 4
  %v342 = vadd.f32 %v340, %v341
  %v343 = vrot.slane %v342, 2
  %v344 = vadd.f32 %v342, %v343
  %v345 = vrot.slane %v344, 1
  %v346 = vadd.f32 %v344, %v345
  %vm347 = vcmask 1040384
  %v348 = vsel %vm347, %v201, %v245
  %vm349 = vcmask 1041408
  %v350 = vsel %vm349, %v348, %v289
  %vm351 = vcmask 1042432
  %v352 = vsel %vm351, %v350, %v346
  %vm353 = vcmask 60416
  %354 = vst.msk [vmem:[%s3] sm:$0xf] %vm353, %v352
  // Predicated region
  $region14: #{_lambda_.1} parent=0 // pred_check
    _
  $region15: #{_lambda_.1} parent=0 // pred_check_branch
    %356 = sbr.rel (0) target = $region17
  $region16: #{_lambda_.1} parent=0 // pred_region
    _
  $region17: #{_lambda_.1} parent=0 // pred_fallthru
    _
  // Predicated region
  $region18: #{_lambda_.1} parent=0 // pred_check
    _
  $region19: #{_lambda_.1} parent=0 // pred_check_branch
    %358 = sbr.rel (0) target = $region21
  $region20: #{_lambda_.1} parent=0 // pred_region
    _
  $region21: #{_lambda_.1} parent=0 // pred_fallthru
    _

</llo_original>
